<compile_context>
chip_gen: v6e
topology: v6e:2x2x1
jax: 0.10.0
libtpu: 0.0.40
codegen_flags: <defaults>
</compile_context>

<pallas_src>
import functools

import jax
import jax.numpy as jnp
import numpy as np
from jax.experimental import pallas as pl
from jax.experimental.pallas import tpu as pltpu

HEAD_LANES = 128  # per-head axis padded to a full vreg lane width


def _round_up(x, m):
    return (x + m - 1) // m * m


def _linear_attention_kernel(x_ref, w_ref, b_ref, tril_ref, hm_ref, woh_ref,
                             bo_ref, out_ref, totals_ref, carry_ref):
    """One (batch, seq-chunk) tile per grid step.

    Shapes (H = hidden, HP = H padded to 128, NHP = 128 lane-padded heads,
            FN = 2*HP + NHP, tS = seq chunk):
      x_ref:      [1, tS, H]    input hidden states (mxu dtype)
      w_ref:      [H, FN]       fused [Wk.T | Wv.T | Wq.T@head_onehot] (mxu dtype)
      b_ref:      [1, FN]       fused biases (f32)
      tril_ref:   [tS, tS]      hoisted lower-triangular causal mask (mxu dtype)
      hm_ref:     [HP, NHP]     head-membership one-hot (mxu dtype)
      woh_ref:    [NHP, HP]     head one-hot folded through output projection
      bo_ref:     [1, HP]       output bias (f32, lane-padded)
      out_ref:    [1, tS, HP]   output tile (lane-dense; padding sliced in wrapper)
      totals_ref: [1, 1, NHP]   final per-head sum_t k_t.v_t (written at last chunk)
      carry_ref:  [1, NHP]      f32 VMEM scratch: running cumsum prefix
    """
    si = pl.program_id(1)
    HP = hm_ref.shape[0]

    # Reset the running per-head k.v prefix at the first seq chunk of each batch.
    @pl.when(si == 0)
    def _():
        carry_ref[...] = jnp.zeros_like(carry_ref)

    x = x_ref[0]                                                     # [tS, H]

    # Single fused projection on the MXU (f32 accumulate), f32 bias add, then
    # lane-aligned (128-multiple) column slices -> k, v, per-head q row-sums.
    proj = jnp.dot(x, w_ref[...],
                   preferred_element_type=jnp.float32) + b_ref[...]  # [tS, FN]
    k = proj[:, :HP]                                                 # [tS, HP]
    v = proj[:, HP:2 * HP]                                           # [tS, HP]
    q_sum = proj[:, 2 * HP:]                                         # [tS, NHP]

    # Per-head scalar kv_t = k_t . v_t via one-hot segment-sum (mxu dtype operands,
    # f32 accumulation).  Padded columns of k/v are exactly zero -> no leakage.
    kv = (k * v).astype(hm_ref.dtype)
    s_t = jnp.dot(kv, hm_ref[...],
                  preferred_element_type=jnp.float32)                # [tS, NHP]

    # Causal cumulative sum inside the tile via the hoisted tril matmul, plus the
    # f32 prefix carried from previous seq chunks.
    s_cum = jnp.dot(tril_ref[...], s_t.astype(tril_ref.dtype),
                    preferred_element_type=jnp.float32) + carry_ref[...]

    # o_t (per head) = cumsum_t(k.v) * sum_d(q_t), replicated over head_dim,
    # folded through the output projection: out = vals @ (onehot.T @ Wo.T) + bo.
    vals = s_cum * q_sum                                             # [tS, NHP] f32
    out = jnp.dot(vals.astype(woh_ref.dtype), woh_ref[...],
                  preferred_element_type=jnp.float32) + bo_ref[...]  # [tS, HP]
    out_ref[0] = out.astype(out_ref.dtype)

    # Carry the updated running totals (last row of the causal cumsum).
    tS = s_cum.shape[0]
    carry_ref[...] = s_cum[tS - 1:tS, :]

    # Emit the per-head totals only once, at the last seq chunk of each batch.
    @pl.when(si == pl.num_programs(1) - 1)
    def _():
        totals_ref[0] = carry_ref[...]


@functools.partial(jax.jit, static_argnames=("num_heads", "seq_block",
                                              "mxu_dtype", "out_dtype"))
def linear_attention_forward(x, params, num_heads, seq_block=None,
                             mxu_dtype=jnp.float32, out_dtype=jnp.float32):
    """x: [B, S, H] f32.  Returns (output [B, S, H] out_dtype, state [B, NH, HD, HD] f32).

    mxu_dtype=jnp.bfloat16 is recommended on v5e, v6e and v7x (MXU is bf16-native,
    f32 is multi-pass); all accumulation / carries stay f32 in the kernel.
    out_dtype=jnp.bfloat16 halves output HBM writeback (biggest store-side lever
    on v5e) if the consumer tolerates it.
    """
    B, S, H = x.shape
    NH = num_heads
    HD = H // NH
    NHP = HEAD_LANES
    HP = max(_round_up(H, 128), 128)     # lane-dense padded hidden dim
    FN = 2 * HP + NHP                    # fused projection width

    if seq_block is None:
        # Amortizes ~0.35us/step and fills the 256-wide MXU on v6e/v7x; sweep
        # 256-512 in production.  (tS = S makes the tril matmul quadratic in S.)
        seq_block = 256 if S % 256 == 0 else S
    if S % seq_block != 0:
        # TODO(synk): ragged final chunk not supported; pad S outside if needed.
        raise ValueError(f"seq_len {S} must be divisible by seq_block {seq_block}")
    tS = seq_block
    num_seq_blocks = S // tS

    f32 = jnp.float32

    # Head-membership one-hot, padded to [HP, NHP] (rows >= H and cols >= NH zero).
    d = jnp.arange(HP)
    h = jnp.arange(NHP)
    hm = ((d[:, None] // HD == h[None, :])
          & (d[:, None] < H) & (h[None, :] < NH)).astype(f32)

    def pad_cols(a, n):
        return jnp.pad(a, ((0, 0), (0, n - a.shape[1])))

    # Exact foldings (reshape+sum, computed once in f32):
    #   q_sum  = x @ (Wq.T @ onehot) + bq @ onehot
    #   output = vals @ (onehot.T @ Wo.T) + bo
    wq_head = params["wq"].T.astype(f32).reshape(H, NH, HD).sum(axis=2)   # [H, NH]
    wq_head = pad_cols(wq_head, NHP)                                      # [H, NHP]
    bq_head = jnp.pad(params["bq"].astype(f32).reshape(NH, HD).sum(axis=1),
                      (0, NHP - NH))                                      # [NHP]
    wo_head = params["wo"].T.astype(f32).reshape(NH, HD, H).sum(axis=1)   # [NH, H]
    wo_head = jnp.pad(wo_head, ((0, NHP - NH), (0, HP - H)))              # [NHP, HP]
    bo_pad = jnp.pad(params["bo"].astype(f32), (0, HP - H)).reshape(1, HP)

    # Fused RHS for the single x-LHS matmul: [Wk.T | Wv.T | folded Wq], each
    # segment padded to a 128-multiple so in-kernel slices are lane-aligned.
    wk = pad_cols(params["wk"].T.astype(f32), HP)
    wv = pad_cols(params["wv"].T.astype(f32), HP)
    fused_w = jnp.concatenate([wk, wv, wq_head], axis=1)                  # [H, FN]
    bk = jnp.pad(params["bk"].astype(f32), (0, HP - H))
    bv = jnp.pad(params["bv"].astype(f32), (0, HP - H))
    fused_b = jnp.concatenate([bk, bv, bq_head]).reshape(1, FN)           # f32

    # Hoisted causal mask (0/1 is exact in bf16).
    tril = jnp.tril(jnp.ones((tS, tS), f32))

    args = (
        x.astype(mxu_dtype),
        fused_w.astype(mxu_dtype), fused_b,
        tril.astype(mxu_dtype),
        hm.astype(mxu_dtype),
        wo_head.astype(mxu_dtype), bo_pad,
    )

    # Constant-index blocks: single-buffered (their block index never changes).
    def const_spec(shape):
        return pl.BlockSpec(shape, lambda b, s: (0,) * len(shape),
                            pipeline_mode=pl.Buffered(1))

    in_specs = [
        pl.BlockSpec((1, tS, H), lambda b, s: (b, s, 0)),   # x (seq-tiled)
        const_spec((H, FN)), const_spec((1, FN)),           # fused W, fused bias
        const_spec((tS, tS)),                               # tril
        const_spec((HP, NHP)),                              # head one-hot
        const_spec((NHP, HP)), const_spec((1, HP)),         # folded Wo, bo
    ]
    out_specs = (
        pl.BlockSpec((1, tS, HP), lambda b, s: (b, s, 0)),  # lane-dense output
        pl.BlockSpec((1, 1, NHP), lambda b, s: (b, 0, 0)),  # per-head totals
    )

    mxu_bytes = jnp.dtype(mxu_dtype).itemsize
    out_bytes = jnp.dtype(out_dtype).itemsize

    # VMEM footprint: double-buffered x/out tiles + single-buffered constants +
    # scratch + f32 intermediates headroom.  Clamped for safety (v7x has 64 MiB).
    vmem_est = (2 * tS * H * mxu_bytes
                + 2 * tS * HP * out_bytes
                + 2 * NHP * 4
                + H * FN * mxu_bytes + FN * 4
                + tS * tS * mxu_bytes
                + HP * NHP * mxu_bytes
                + NHP * HP * mxu_bytes + HP * 4
                + NHP * 4
                + 8 * tS * FN * 4)
    vmem_limit = int(min(max(vmem_est + (8 << 20), 32 << 20), 96 << 20))

    flops = int(2 * B * S * (H * FN + HP * NHP + tS * NHP + NHP * HP))
    bytes_accessed = int(
        B * S * (H * mxu_bytes + HP * out_bytes)
        + B * NHP * 4
        + (H * FN + tS * tS + HP * NHP + NHP * HP) * mxu_bytes
        + (FN + HP) * 4)
    cost = pl.CostEstimate(flops=flops, transcendentals=0,
                           bytes_accessed=bytes_accessed)

    out_pad, totals = pl.pallas_call(
        _linear_attention_kernel,
        out_shape=(
            jax.ShapeDtypeStruct((B, S, HP), out_dtype),
            jax.ShapeDtypeStruct((B, 1, NHP), jnp.float32),
        ),
        grid=(B, num_seq_blocks),
        in_specs=in_specs,
        out_specs=out_specs,
        scratch_shapes=[pltpu.VMEM((1, NHP), jnp.float32)],   # f32 cumsum carry
        compiler_params=pltpu.CompilerParams(
            # Batch tiles are independent (megacore-shardable); the seq axis
            # carries the running cumsum prefix so it must stay "arbitrary".
            dimension_semantics=("parallel", "arbitrary"),
            vmem_limit_bytes=vmem_limit,
        ),
        cost_estimate=cost,
    )(*args)

    out = out_pad[..., :H]
    # Every entry of a head's final state equals sum_t k_t.v_t: cheap XLA
    # broadcast outside the kernel beats a masked sub-lane store inside it.
    totals_nh = totals[:, 0, :NH]                                    # [B, NH] f32
    state = jnp.broadcast_to(totals_nh[:, :, None, None], (B, NH, HD, HD))
    return out, state


def reference_forward(x, params, num_heads):
    """Pure-JAX reference mirroring the PyTorch loop semantics."""
    B, S, H = x.shape
    HD = H // num_heads
    q = x @ params["wq"].T + params["bq"]
    k = x @ params["wk"].T + params["bk"]
    v = x @ params["wv"].T + params["bv"]
    q = q.reshape(B, S, num_heads, HD).transpose(0, 2, 1, 3)        # [B,NH,S,HD]
    k = k.reshape(B, S, num_heads, HD).transpose(0, 2, 1, 3)
    v = v.reshape(B, S, num_heads, HD).transpose(0, 2, 1, 3)
    s_t = jnp.sum(k * v, axis=-1)                                   # [B,NH,S]
    s_cum = jnp.cumsum(s_t, axis=-1)                                # [B,NH,S]
    q_sum = jnp.sum(q, axis=-1)                                     # [B,NH,S]
    o = jnp.broadcast_to((s_cum * q_sum)[..., None], (B, num_heads, S, HD))
    out = o.transpose(0, 2, 1, 3).reshape(B, S, H) @ params["wo"].T + params["bo"]
    state = jnp.broadcast_to(s_cum[:, :, -1][:, :, None, None],
                             (B, num_heads, HD, HD))
    return out, state


def init_params(key, hidden_dim):
    """Deterministic init matching nn.Linear default: U(-1/sqrt(H), 1/sqrt(H))."""
    bound = 1.0 / np.sqrt(hidden_dim)
    keys = jax.random.split(key, 8)

    def u(k, shape):
        return jax.random.uniform(k, shape, jnp.float32, -bound, bound)

    return {
        "wq": u(keys[0], (hidden_dim, hidden_dim)), "bq": u(keys[1], (hidden_dim,)),
        "wk": u(keys[2], (hidden_dim, hidden_dim)), "bk": u(keys[3], (hidden_dim,)),
        "wv": u(keys[4], (hidden_dim, hidden_dim)), "bv": u(keys[5], (hidden_dim,)),
        "wo": u(keys[6], (hidden_dim, hidden_dim)), "bo": u(keys[7], (hidden_dim,)),
    }


def _rel_err(a, b):
    a = np.asarray(a, np.float64)
    b = np.asarray(b, np.float64)
    return float(np.linalg.norm(a - b) / (np.linalg.norm(b) + 1e-12))


if __name__ == "__main__":
    B, S, H, NH = 2, 32, 32, 4  # small demo shapes; seq tiled into 2 chunks of 16

    key = jax.random.PRNGKey(0)
    k_x, k_p = jax.random.split(key)
    x = jax.random.normal(k_x, (B, S, H), jnp.float32)
    params = init_params(k_p, H)

    ref_out, ref_state = reference_forward(x, params, NH)

    # f32 MXU path: strict semantic check (exercises the multi-chunk cumsum carry).
    out, state = linear_attention_forward(x, params, num_heads=NH, seq_block=16,
                                          mxu_dtype=jnp.float32)
    out = jax.block_until_ready(out)
    state = jax.block_until_ready(state)
    np.testing.assert_allclose(np.asarray(out), np.asarray(ref_out),
                               rtol=1e-3, atol=1e-3)
    np.testing.assert_allclose(np.asarray(state), np.asarray(ref_state),
                               rtol=1e-3, atol=1e-3)

    # bf16 MXU-input path (recommended on v5e/v6e/v7x): accumulation stays f32,
    # so only input-rounding error remains -> relative-norm sanity check.
    out_bf, state_bf = linear_attention_forward(x, params, num_heads=NH,
                                                seq_block=16,
                                                mxu_dtype=jnp.bfloat16)
    out_bf = jax.block_until_ready(out_bf)
    state_bf = jax.block_until_ready(state_bf)
    assert _rel_err(out_bf, ref_out) < 5e-2, _rel_err(out_bf, ref_out)
    assert _rel_err(state_bf, ref_state) < 5e-2, _rel_err(state_bf, ref_state)

    print("KERNEL_OK")
</pallas_src>

<mosaic_0001>
module attributes {stable_mosaic.version = 11 : i64} {
  func.func @_linear_attention_kernel(%arg0: i32, %arg1: i32, %arg2: memref<1x16x32xf32, #tpu.memory_space<vmem>>, %arg3: memref<32x384xf32, #tpu.memory_space<vmem>>, %arg4: memref<1x384xf32, #tpu.memory_space<vmem>>, %arg5: memref<16x16xf32, #tpu.memory_space<vmem>>, %arg6: memref<128x128xf32, #tpu.memory_space<vmem>>, %arg7: memref<128x128xf32, #tpu.memory_space<vmem>>, %arg8: memref<1x128xf32, #tpu.memory_space<vmem>>, %arg9: memref<1x16x128xf32, #tpu.memory_space<vmem>>, %arg10: memref<1x1x128xf32, #tpu.memory_space<vmem>>, %arg11: memref<1x128xf32, #tpu.memory_space<vmem>>) attributes {dimension_semantics = [#tpu.dimension_semantics<parallel>, #tpu.dimension_semantics<arbitrary>], iteration_bounds = array<i64: 2, 2>, scalar_prefetch = 0 : i64, scratch_operands = 1 : i64, tpu.core_type = #tpu.core_type<tc>, window_params = [{transform_indices = @transform_0, window_bounds = array<i64: 1, 16, 32>}, {pipeline_mode = #tpu.pipeline_mode<synchronous>, transform_indices = @transform_1, window_bounds = array<i64: 32, 384>}, {pipeline_mode = #tpu.pipeline_mode<synchronous>, transform_indices = @transform_2, window_bounds = array<i64: 1, 384>}, {pipeline_mode = #tpu.pipeline_mode<synchronous>, transform_indices = @transform_3, window_bounds = array<i64: 16, 16>}, {pipeline_mode = #tpu.pipeline_mode<synchronous>, transform_indices = @transform_4, window_bounds = array<i64: 128, 128>}, {pipeline_mode = #tpu.pipeline_mode<synchronous>, transform_indices = @transform_5, window_bounds = array<i64: 128, 128>}, {pipeline_mode = #tpu.pipeline_mode<synchronous>, transform_indices = @transform_6, window_bounds = array<i64: 1, 128>}, {transform_indices = @transform_7, window_bounds = array<i64: 1, 16, 128>}, {transform_indices = @transform_8, window_bounds = array<i64: 1, 1, 128>}]} {
    %c0_i32 = arith.constant 0 : i32
    %0 = arith.cmpi eq, %arg1, %c0_i32 : i32
    %1 = arith.extui %0 : i1 to i32
    %c0_i32_0 = arith.constant 0 : i32
    %2 = arith.cmpi ne, %1, %c0_i32_0 : i32
    scf.if %2 {
      %cst_26 = arith.constant 0.000000e+00 : f32
      %35 = vector.broadcast %cst_26 : f32 to vector<1x128xf32>
      %c0_27 = arith.constant 0 : index
      %c0_28 = arith.constant 0 : index
      %36 = vector.load %arg11[%c0_27, %c0_28] : memref<1x128xf32, #tpu.memory_space<vmem>>, vector<1x128xf32>
      tpu.vector_store %arg11[%c0_27, %c0_28], %35 {strides = array<i32>} : memref<1x128xf32, #tpu.memory_space<vmem>>, vector<1x128xf32>,
    } else {
    }
    %c0 = arith.constant 0 : index
    %c0_1 = arith.constant 0 : index
    %c0_2 = arith.constant 0 : index
    %3 = vector.load %arg2[%c0, %c0_1, %c0_2] : memref<1x16x32xf32, #tpu.memory_space<vmem>>, vector<1x16x32xf32>
    %4 = vector.shape_cast %3 : vector<1x16x32xf32> to vector<16x32xf32>
    %c0_3 = arith.constant 0 : index
    %c0_4 = arith.constant 0 : index
    %5 = vector.load %arg3[%c0_3, %c0_4] : memref<32x384xf32, #tpu.memory_space<vmem>>, vector<32x384xf32>
    %cst = arith.constant dense<0.000000e+00> : vector<16x384xf32>
    %6 = tpu.matmul %4, %5, %cst {dimension_numbers = #tpu.dot_dimension_numbers<[1], [0], [0], [1], [0, 0, 1, 1], [], []>} : vector<16x32xf32>, vector<32x384xf32>, vector<16x384xf32> -> vector<16x384xf32>
    %c0_5 = arith.constant 0 : index
    %c0_6 = arith.constant 0 : index
    %7 = vector.load %arg4[%c0_5, %c0_6] : memref<1x384xf32, #tpu.memory_space<vmem>>, vector<1x384xf32>
    %8 = vector.broadcast %7 : vector<1x384xf32> to vector<16x384xf32>
    %9 = arith.addf %6, %8 : vector<16x384xf32>
    %10 = vector.extract_strided_slice %9 {offsets = [0, 0], sizes = [16, 128], strides = [1, 1]} : vector<16x384xf32> to vector<16x128xf32>
    %11 = vector.extract_strided_slice %9 {offsets = [0, 128], sizes = [16, 128], strides = [1, 1]} : vector<16x384xf32> to vector<16x128xf32>
    %12 = vector.extract_strided_slice %9 {offsets = [0, 256], sizes = [16, 128], strides = [1, 1]} : vector<16x384xf32> to vector<16x128xf32>
    %13 = arith.mulf %10, %11 : vector<16x128xf32>
    %c0_7 = arith.constant 0 : index
    %c0_8 = arith.constant 0 : index
    %14 = vector.load %arg6[%c0_7, %c0_8] : memref<128x128xf32, #tpu.memory_space<vmem>>, vector<128x128xf32>
    %cst_9 = arith.constant dense<0.000000e+00> : vector<16x128xf32>
    %15 = tpu.matmul %13, %14, %cst_9 {dimension_numbers = #tpu.dot_dimension_numbers<[1], [0], [0], [1], [0, 0, 1, 1], [], []>} : vector<16x128xf32>, vector<128x128xf32>, vector<16x128xf32> -> vector<16x128xf32>
    %c0_10 = arith.constant 0 : index
    %c0_11 = arith.constant 0 : index
    %16 = vector.load %arg5[%c0_10, %c0_11] : memref<16x16xf32, #tpu.memory_space<vmem>>, vector<16x16xf32>
    %cst_12 = arith.constant dense<0.000000e+00> : vector<16x128xf32>
    %17 = tpu.matmul %16, %15, %cst_12 {dimension_numbers = #tpu.dot_dimension_numbers<[1], [0], [0], [1], [0, 0, 1, 1], [], []>} : vector<16x16xf32>, vector<16x128xf32>, vector<16x128xf32> -> vector<16x128xf32>
    %c0_13 = arith.constant 0 : index
    %c0_14 = arith.constant 0 : index
    %18 = vector.load %arg11[%c0_13, %c0_14] : memref<1x128xf32, #tpu.memory_space<vmem>>, vector<1x128xf32>
    %19 = vector.broadcast %18 : vector<1x128xf32> to vector<16x128xf32>
    %20 = arith.addf %17, %19 : vector<16x128xf32>
    %21 = arith.mulf %20, %12 : vector<16x128xf32>
    %c0_15 = arith.constant 0 : index
    %c0_16 = arith.constant 0 : index
    %22 = vector.load %arg7[%c0_15, %c0_16] : memref<128x128xf32, #tpu.memory_space<vmem>>, vector<128x128xf32>
    %cst_17 = arith.constant dense<0.000000e+00> : vector<16x128xf32>
    %23 = tpu.matmul %21, %22, %cst_17 {dimension_numbers = #tpu.dot_dimension_numbers<[1], [0], [0], [1], [0, 0, 1, 1], [], []>} : vector<16x128xf32>, vector<128x128xf32>, vector<16x128xf32> -> vector<16x128xf32>
    %c0_18 = arith.constant 0 : index
    %c0_19 = arith.constant 0 : index
    %24 = vector.load %arg8[%c0_18, %c0_19] : memref<1x128xf32, #tpu.memory_space<vmem>>, vector<1x128xf32>
    %25 = vector.broadcast %24 : vector<1x128xf32> to vector<16x128xf32>
    %26 = arith.addf %23, %25 : vector<16x128xf32>
    %c0_20 = arith.constant 0 : index
    %c0_21 = arith.constant 0 : index
    %c0_22 = arith.constant 0 : index
    %27 = vector.load %arg9[%c0_20, %c0_21, %c0_22] : memref<1x16x128xf32, #tpu.memory_space<vmem>>, vector<1x16x128xf32>
    %28 = vector.shape_cast %27 : vector<1x16x128xf32> to vector<16x128xf32>
    %29 = vector.shape_cast %26 : vector<16x128xf32> to vector<1x16x128xf32>
    tpu.vector_store %arg9[%c0_20, %c0_21, %c0_22], %29 {strides = array<i32>} : memref<1x16x128xf32, #tpu.memory_space<vmem>>, vector<1x16x128xf32>,
    %30 = vector.extract_strided_slice %20 {offsets = [15, 0], sizes = [1, 128], strides = [1, 1]} : vector<16x128xf32> to vector<1x128xf32>
    %c0_23 = arith.constant 0 : index
    %c0_24 = arith.constant 0 : index
    %31 = vector.load %arg11[%c0_23, %c0_24] : memref<1x128xf32, #tpu.memory_space<vmem>>, vector<1x128xf32>
    tpu.vector_store %arg11[%c0_23, %c0_24], %30 {strides = array<i32>} : memref<1x128xf32, #tpu.memory_space<vmem>>, vector<1x128xf32>,
    %c1_i32 = arith.constant 1 : i32
    %32 = arith.cmpi eq, %arg1, %c1_i32 : i32
    %33 = arith.extui %32 : i1 to i32
    %c0_i32_25 = arith.constant 0 : i32
    %34 = arith.cmpi ne, %33, %c0_i32_25 : i32
    scf.if %34 {
      %c0_26 = arith.constant 0 : index
      %c0_27 = arith.constant 0 : index
      %35 = vector.load %arg11[%c0_26, %c0_27] : memref<1x128xf32, #tpu.memory_space<vmem>>, vector<1x128xf32>
      %c0_28 = arith.constant 0 : index
      %c0_29 = arith.constant 0 : index
      %c0_30 = arith.constant 0 : index
      %36 = vector.load %arg10[%c0_28, %c0_29, %c0_30] : memref<1x1x128xf32, #tpu.memory_space<vmem>>, vector<1x1x128xf32>
      %37 = vector.shape_cast %36 : vector<1x1x128xf32> to vector<1x128xf32>
      %38 = vector.shape_cast %35 : vector<1x128xf32> to vector<1x1x128xf32>
      tpu.vector_store %arg10[%c0_28, %c0_29, %c0_30], %38 {strides = array<i32>} : memref<1x1x128xf32, #tpu.memory_space<vmem>>, vector<1x1x128xf32>,
    } else {
    }
    return
  }
  func.func @transform_0(%arg0: i32, %arg1: i32) -> (i32, i32, i32) {
    %c0_i32 = arith.constant 0 : i32
    %c0_i32_0 = arith.constant 0 : i32
    return %arg0, %arg1, %c0_i32 : i32, i32, i32
  }
  func.func @transform_1(%arg0: i32, %arg1: i32) -> (i32, i32) {
    %c0_i32 = arith.constant 0 : i32
    %c0_i32_0 = arith.constant 0 : i32
    %c0_i32_1 = arith.constant 0 : i32
    return %c0_i32, %c0_i32_0 : i32, i32
  }
  func.func @transform_2(%arg0: i32, %arg1: i32) -> (i32, i32) {
    %c0_i32 = arith.constant 0 : i32
    %c0_i32_0 = arith.constant 0 : i32
    %c0_i32_1 = arith.constant 0 : i32
    return %c0_i32, %c0_i32_0 : i32, i32
  }
  func.func @transform_3(%arg0: i32, %arg1: i32) -> (i32, i32) {
    %c0_i32 = arith.constant 0 : i32
    %c0_i32_0 = arith.constant 0 : i32
    %c0_i32_1 = arith.constant 0 : i32
    return %c0_i32, %c0_i32_0 : i32, i32
  }
  func.func @transform_4(%arg0: i32, %arg1: i32) -> (i32, i32) {
    %c0_i32 = arith.constant 0 : i32
    %c0_i32_0 = arith.constant 0 : i32
    %c0_i32_1 = arith.constant 0 : i32
    return %c0_i32, %c0_i32_0 : i32, i32
  }
  func.func @transform_5(%arg0: i32, %arg1: i32) -> (i32, i32) {
    %c0_i32 = arith.constant 0 : i32
    %c0_i32_0 = arith.constant 0 : i32
    %c0_i32_1 = arith.constant 0 : i32
    return %c0_i32, %c0_i32_0 : i32, i32
  }
  func.func @transform_6(%arg0: i32, %arg1: i32) -> (i32, i32) {
    %c0_i32 = arith.constant 0 : i32
    %c0_i32_0 = arith.constant 0 : i32
    %c0_i32_1 = arith.constant 0 : i32
    return %c0_i32, %c0_i32_0 : i32, i32
  }
  func.func @transform_7(%arg0: i32, %arg1: i32) -> (i32, i32, i32) {
    %c0_i32 = arith.constant 0 : i32
    %c0_i32_0 = arith.constant 0 : i32
    return %arg0, %arg1, %c0_i32 : i32, i32, i32
  }
  func.func @transform_8(%arg0: i32, %arg1: i32) -> (i32, i32, i32) {
    %c0_i32 = arith.constant 0 : i32
    %c0_i32_0 = arith.constant 0 : i32
    %c0_i32_1 = arith.constant 0 : i32
    return %arg0, %c0_i32, %c0_i32_0 : i32, i32, i32
  }
}

</mosaic_0001>

<llo_original>
// kernel: linear_attention_forward.1
$region0: #{linear_attention_forward.1}
  #allocation0 [shape = 'u32[]', space=smem, size = 0x4, offset = 0x4, fixed_abs, tag = 'smem constant byte address 0x4 - core index']
  #allocation1 [shape = 'u32[144,128]{1,0:T(1,128)}', space=vmem, size = 0x12000, scoped, tag = 'internal scratch']
  #allocation2 [shape = 'f32[1,128]{1,0:T(1,128)}', space=vmem, size = 0x200, scoped, tag = 'scratch operand']
  %s0 = inlined_call_operand.vmem [shape: f32[2,32,32], index: 0, kind: input, shape index: {}]
  %s1 = inlined_call_operand.vmem [shape: f32[32,384], index: 1, kind: input, shape index: {}]
  %s2 = inlined_call_operand.vmem [shape: f32[1,384], index: 2, kind: input, shape index: {}]
  %s3 = inlined_call_operand.vmem [shape: f32[16,16], index: 3, kind: input, shape index: {}]
  %s4 = inlined_call_operand.vmem [shape: f32[128,128], index: 4, kind: input, shape index: {}]
  %s5 = inlined_call_operand.vmem [shape: f32[128,128], index: 5, kind: input, shape index: {}]
  %s6 = inlined_call_operand.vmem [shape: f32[1,128], index: 6, kind: input, shape index: {}]
  %s7 = inlined_call_operand.hbm [shape: f32[2,32,128], index: 7, kind: output, shape index: {0}]
  %s8 = inlined_call_operand.vmem [shape: f32[2,1,128], index: 8, kind: output, shape index: {1}]
  %9 = xla_tuple %s7, %s8
  %s10 = sld [smem:[#allocation0]]
  $region77: #{linear_attention_forward.1} parent=0
    _
  %s12 = ssub.s32 1, %s10
  %s13 = scalar_select 0, %s12, %s10
  $region1: #{linear_attention_forward.1} parent=0
    #allocation3 [shape = 'u8[16384]{0}', space=vmem, size = 0x4000, scoped, tag = 'output window, operand 0']
    #allocation4 [shape = 's32[2]{0}', space=sflag, size = 0x8, scoped, tag = 'scoped memory for linear_attention_forward.1']
    %14 = vsyncpa [#allocation4], 0
    %s15 = scalar_lea.sflag [#allocation4], 1
    %16 = vsyncpa %s15, 0
    loop: start=0, step=1, limit=6
    $region2: #{linear_attention_forward.1} parent=1 // loop_pre_header
      _
    $region3: #{linear_attention_forward.1} parent=1 // loop_header
      %s18 = sphi 0, %s22
      %p19 = scmp.ge.s32.totalorder %s18, 6
      %s25 = sphi 0, %s37
      %s26 = sphi 0, %s33
      %s27 = sphi 0, %s25
      %s28 = sphi 0, %s26
      %s29 = sphi 0, %s27
      %s30 = sphi 0, %s28
      %s42 = sphi 0, %s44
      %s45 = sphi 0, %s42
      %s46 = sphi 0, %s45
      %s62 = sphi 0, %s46
      %s66 = sphi 0, %s66
      %s68 = sphi 0, %s66
      %s69 = sphi 0, %s68
      %s83 = sphi 0, %s69
      %s87 = sphi 0, %s87
      %s89 = sphi 0, %s87
      %s90 = sphi 0, %s89
      %s104 = sphi 0, %s90
      %s108 = sphi 0, %s108
      %s110 = sphi 0, %s108
      %s111 = sphi 0, %s110
      %s125 = sphi 0, %s111
      %s129 = sphi 0, %s129
      %s131 = sphi 0, %s129
      %s132 = sphi 0, %s131
      %s146 = sphi 0, %s132
      %s150 = sphi 0, %s150
      %s152 = sphi 0, %s150
      %s153 = sphi 0, %s152
      %s167 = sphi 0, %s153
      %s171 = sphi 0, %s171
      %s173 = sphi 0, %s171
      %s174 = sphi 0, %s173
      %s188 = sphi 0, %s174
      %s196 = sphi 0, %s198
      %s199 = sphi 0, %s196
      %s200 = sphi 0, %s199
      %s216 = sphi 0, %s200
      %s222 = sphi 0, %s224
      %s225 = sphi 0, %s222
      %s226 = sphi 0, %s225
      %s242 = sphi 0, %s226
    $region4: #{linear_attention_forward.1} parent=1 // loop_header_branch
      %21 = sbr.rel (%p19) target = $region8
    $region5: #{linear_attention_forward.1} parent=1 // loop_body
      %s23 = ssub.s32 %s18, 1
      %s24 = ssub.s32 %s18, 2
      %s31 = sadd.s32 1, %s26
      %p32 = scmp.ge.s32.totalorder %s31, 2
      %s33 = scalar_select %p32, 0, %s31
      %s34 = sadd.s32 1, %s25
      %s35 = scalar_select %p32, %s34, %s25
      %p36 = scmp.ge.s32.totalorder %s35, 2
      %s37 = scalar_select %p36, 0, %s35
      %s38 = ssub.s32 %s25, %s37
      %s39 = ssub.s32 %s26, %s33
      %s40 = sor.u32 %s38, %s39
      %p41 = scmp.eq.s32.totalorder %s40, 0
      %s43 = sadd.s32 %s42, 1
      %s44 = scalar_select %p41, %s42, %s43
      %p47 = pneg %p41
      %p48 = scmp.eq.s32.totalorder %s18, 3
      %p49 = por %p47, %p48
      %p50 = scmp.ne.s32.totalorder %s42, %s45
      %p51 = scmp.eq.s32.totalorder %s18, 0
      %p52 = por %p50, %p51
      %p53 = scmp.ne.s32.totalorder %s42, %s45
      %p54 = scmp.eq.s32.totalorder %s23, 3
      %p55 = por %p53, %p54
      %p56 = scmp.ne.s32.totalorder %s45, %s46
      %p57 = scmp.eq.s32.totalorder %s23, 0
      %p58 = por %p56, %p57
      %p59 = scmp.ne.s32.totalorder %s45, %s46
      %p60 = scmp.eq.s32.totalorder %s24, 3
      %p61 = por %p59, %p60
      %p63 = scmp.ne.s32.totalorder %s46, %s62
      %p64 = scmp.eq.s32.totalorder %s24, 0
      %p65 = por %p63, %p64
      %s67 = sadd.s32 %s66, 1
      %p70 = scmp.eq.s32.totalorder %s18, 3
      %p71 = scmp.ne.s32.totalorder %s66, %s68
      %p72 = scmp.eq.s32.totalorder %s18, 0
      %p73 = por %p71, %p72
      %p74 = scmp.ne.s32.totalorder %s66, %s68
      %p75 = scmp.eq.s32.totalorder %s23, 3
      %p76 = por %p74, %p75
      %p77 = scmp.ne.s32.totalorder %s68, %s69
      %p78 = scmp.eq.s32.totalorder %s23, 0
      %p79 = por %p77, %p78
      %p80 = scmp.ne.s32.totalorder %s68, %s69
      %p81 = scmp.eq.s32.totalorder %s24, 3
      %p82 = por %p80, %p81
      %p84 = scmp.ne.s32.totalorder %s69, %s83
      %p85 = scmp.eq.s32.totalorder %s24, 0
      %p86 = por %p84, %p85
      %s88 = sadd.s32 %s87, 1
      %p91 = scmp.eq.s32.totalorder %s18, 3
      %p92 = scmp.ne.s32.totalorder %s87, %s89
      %p93 = scmp.eq.s32.totalorder %s18, 0
      %p94 = por %p92, %p93
      %p95 = scmp.ne.s32.totalorder %s87, %s89
      %p96 = scmp.eq.s32.totalorder %s23, 3
      %p97 = por %p95, %p96
      %p98 = scmp.ne.s32.totalorder %s89, %s90
      %p99 = scmp.eq.s32.totalorder %s23, 0
      %p100 = por %p98, %p99
      %p101 = scmp.ne.s32.totalorder %s89, %s90
      %p102 = scmp.eq.s32.totalorder %s24, 3
      %p103 = por %p101, %p102
      %p105 = scmp.ne.s32.totalorder %s90, %s104
      %p106 = scmp.eq.s32.totalorder %s24, 0
      %p107 = por %p105, %p106
      %s109 = sadd.s32 %s108, 1
      %p112 = scmp.eq.s32.totalorder %s18, 3
      %p113 = scmp.ne.s32.totalorder %s108, %s110
      %p114 = scmp.eq.s32.totalorder %s18, 0
      %p115 = por %p113, %p114
      %p116 = scmp.ne.s32.totalorder %s108, %s110
      %p117 = scmp.eq.s32.totalorder %s23, 3
      %p118 = por %p116, %p117
      %p119 = scmp.ne.s32.totalorder %s110, %s111
      %p120 = scmp.eq.s32.totalorder %s23, 0
      %p121 = por %p119, %p120
      %p122 = scmp.ne.s32.totalorder %s110, %s111
      %p123 = scmp.eq.s32.totalorder %s24, 3
      %p124 = por %p122, %p123
      %p126 = scmp.ne.s32.totalorder %s111, %s125
      %p127 = scmp.eq.s32.totalorder %s24, 0
      %p128 = por %p126, %p127
      %s130 = sadd.s32 %s129, 1
      %p133 = scmp.eq.s32.totalorder %s18, 3
      %p134 = scmp.ne.s32.totalorder %s129, %s131
      %p135 = scmp.eq.s32.totalorder %s18, 0
      %p136 = por %p134, %p135
      %p137 = scmp.ne.s32.totalorder %s129, %s131
      %p138 = scmp.eq.s32.totalorder %s23, 3
      %p139 = por %p137, %p138
      %p140 = scmp.ne.s32.totalorder %s131, %s132
      %p141 = scmp.eq.s32.totalorder %s23, 0
      %p142 = por %p140, %p141
      %p143 = scmp.ne.s32.totalorder %s131, %s132
      %p144 = scmp.eq.s32.totalorder %s24, 3
      %p145 = por %p143, %p144
      %p147 = scmp.ne.s32.totalorder %s132, %s146
      %p148 = scmp.eq.s32.totalorder %s24, 0
      %p149 = por %p147, %p148
      %s151 = sadd.s32 %s150, 1
      %p154 = scmp.eq.s32.totalorder %s18, 3
      %p155 = scmp.ne.s32.totalorder %s150, %s152
      %p156 = scmp.eq.s32.totalorder %s18, 0
      %p157 = por %p155, %p156
      %p158 = scmp.ne.s32.totalorder %s150, %s152
      %p159 = scmp.eq.s32.totalorder %s23, 3
      %p160 = por %p158, %p159
      %p161 = scmp.ne.s32.totalorder %s152, %s153
      %p162 = scmp.eq.s32.totalorder %s23, 0
      %p163 = por %p161, %p162
      %p164 = scmp.ne.s32.totalorder %s152, %s153
      %p165 = scmp.eq.s32.totalorder %s24, 3
      %p166 = por %p164, %p165
      %p168 = scmp.ne.s32.totalorder %s153, %s167
      %p169 = scmp.eq.s32.totalorder %s24, 0
      %p170 = por %p168, %p169
      %s172 = sadd.s32 %s171, 1
      %p175 = scmp.eq.s32.totalorder %s18, 3
      %p176 = scmp.ne.s32.totalorder %s171, %s173
      %p177 = scmp.eq.s32.totalorder %s18, 0
      %p178 = por %p176, %p177
      %p179 = scmp.ne.s32.totalorder %s171, %s173
      %p180 = scmp.eq.s32.totalorder %s23, 3
      %p181 = por %p179, %p180
      %p182 = scmp.ne.s32.totalorder %s173, %s174
      %p183 = scmp.eq.s32.totalorder %s23, 0
      %p184 = por %p182, %p183
      %p185 = scmp.ne.s32.totalorder %s173, %s174
      %p186 = scmp.eq.s32.totalorder %s24, 3
      %p187 = por %p185, %p186
      %p189 = scmp.ne.s32.totalorder %s174, %s188
      %p190 = scmp.eq.s32.totalorder %s24, 0
      %p191 = por %p189, %p190
      %s192 = ssub.s32 %s25, %s37
      %s193 = ssub.s32 %s26, %s33
      %s194 = sor.u32 %s192, %s193
      %p195 = scmp.eq.s32.totalorder %s194, 0
      %s197 = sadd.s32 %s196, 1
      %s198 = scalar_select %p195, %s196, %s197
      %p201 = pneg %p195
      %p202 = scmp.eq.s32.totalorder %s18, 3
      %p203 = por %p201, %p202
      %p204 = scmp.ne.s32.totalorder %s196, %s199
      %p205 = scmp.eq.s32.totalorder %s18, 0
      %p206 = por %p204, %p205
      %p207 = scmp.ne.s32.totalorder %s196, %s199
      %p208 = scmp.eq.s32.totalorder %s23, 3
      %p209 = por %p207, %p208
      %p210 = scmp.ne.s32.totalorder %s199, %s200
      %p211 = scmp.eq.s32.totalorder %s23, 0
      %p212 = por %p210, %p211
      %p213 = scmp.ne.s32.totalorder %s199, %s200
      %p214 = scmp.eq.s32.totalorder %s24, 3
      %p215 = por %p213, %p214
      %p217 = scmp.ne.s32.totalorder %s200, %s216
      %p218 = scmp.eq.s32.totalorder %s24, 0
      %p219 = por %p217, %p218
      %s220 = ssub.s32 %s25, %s37
      %p221 = scmp.eq.s32.totalorder %s220, 0
      %s223 = sadd.s32 %s222, 1
      %s224 = scalar_select %p221, %s222, %s223
      %p227 = pneg %p221
      %p228 = scmp.eq.s32.totalorder %s18, 3
      %p229 = por %p227, %p228
      %p230 = scmp.ne.s32.totalorder %s222, %s225
      %p231 = scmp.eq.s32.totalorder %s18, 0
      %p232 = por %p230, %p231
      %p233 = scmp.ne.s32.totalorder %s222, %s225
      %p234 = scmp.eq.s32.totalorder %s23, 3
      %p235 = por %p233, %p234
      %p236 = scmp.ne.s32.totalorder %s225, %s226
      %p237 = scmp.eq.s32.totalorder %s23, 0
      %p238 = por %p236, %p237
      %p239 = scmp.ne.s32.totalorder %s225, %s226
      %p240 = scmp.eq.s32.totalorder %s24, 3
      %p241 = por %p239, %p240
      %p243 = scmp.ne.s32.totalorder %s226, %s242
      %p244 = scmp.eq.s32.totalorder %s24, 0
      %p245 = por %p243, %p244
      %p246 = scmp.le.s32.totalorder 1, %s18
      %p247 = scmp.lt.s32.totalorder %s18, 5
      %p248 = pnand %p246, %p247
      %p249 = pneg %p248
      // Predicated region
      $region9: #{linear_attention_forward.1} parent=5 // pred_check
        _
      $region10: #{linear_attention_forward.1} parent=5 // pred_check_branch
        %251 = sbr.rel (%p248) target = $region12
      $region11: #{linear_attention_forward.1} parent=5 // pred_region
        %s252 = ssub.s32 %s18, 1
        // Predicated region
        $region13: #{linear_attention_forward.1} parent=11 // pred_check
          %p253 = pneg %p79
        $region14: #{linear_attention_forward.1} parent=11 // pred_check_branch
          %255 = sbr.rel (%p253) target = $region16
        $region15: #{linear_attention_forward.1} parent=11 // pred_region
          _
        $region16: #{linear_attention_forward.1} parent=11 // pred_fallthru
          _
        // Predicated region
        $region17: #{linear_attention_forward.1} parent=11 // pred_check
          %p256 = pneg %p100
        $region18: #{linear_attention_forward.1} parent=11 // pred_check_branch
          %258 = sbr.rel (%p256) target = $region20
        $region19: #{linear_attention_forward.1} parent=11 // pred_region
          _
        $region20: #{linear_attention_forward.1} parent=11 // pred_fallthru
          _
        // Predicated region
        $region21: #{linear_attention_forward.1} parent=11 // pred_check
          %p259 = pneg %p121
        $region22: #{linear_attention_forward.1} parent=11 // pred_check_branch
          %261 = sbr.rel (%p259) target = $region24
        $region23: #{linear_attention_forward.1} parent=11 // pred_region
          _
        $region24: #{linear_attention_forward.1} parent=11 // pred_fallthru
          _
        // Predicated region
        $region25: #{linear_attention_forward.1} parent=11 // pred_check
          %p262 = pneg %p142
        $region26: #{linear_attention_forward.1} parent=11 // pred_check_branch
          %264 = sbr.rel (%p262) target = $region28
        $region27: #{linear_attention_forward.1} parent=11 // pred_region
          _
        $region28: #{linear_attention_forward.1} parent=11 // pred_fallthru
          _
        // Predicated region
        $region29: #{linear_attention_forward.1} parent=11 // pred_check
          %p265 = pneg %p163
        $region30: #{linear_attention_forward.1} parent=11 // pred_check_branch
          %267 = sbr.rel (%p265) target = $region32
        $region31: #{linear_attention_forward.1} parent=11 // pred_region
          _
        $region32: #{linear_attention_forward.1} parent=11 // pred_fallthru
          _
        // Predicated region
        $region33: #{linear_attention_forward.1} parent=11 // pred_check
          %p268 = pneg %p184
        $region34: #{linear_attention_forward.1} parent=11 // pred_check_branch
          %270 = sbr.rel (%p268) target = $region36
        $region35: #{linear_attention_forward.1} parent=11 // pred_region
          _
        $region36: #{linear_attention_forward.1} parent=11 // pred_fallthru
          _
      $region12: #{linear_attention_forward.1} parent=5 // pred_fallthru
        _
      %p271 = scmp.lt.s32.totalorder %s18, 4
      // Predicated region
      $region37: #{linear_attention_forward.1} parent=5 // pred_check
        %p272 = pneg %p271
      $region38: #{linear_attention_forward.1} parent=5 // pred_check_branch
        %274 = sbr.rel (%p272) target = $region40
      $region39: #{linear_attention_forward.1} parent=5 // pred_region
        // Predicated region
        $region41: #{linear_attention_forward.1} parent=39 // pred_check
          %p275 = pneg %p52
        $region42: #{linear_attention_forward.1} parent=39 // pred_check_branch
          %277 = sbr.rel (%p275) target = $region44
        $region43: #{linear_attention_forward.1} parent=39 // pred_region
          %s278 = smul.u32 2, %s26
          %p279 = scmp.lt.s32.totalorder %s25, 1
          %s280 = scalar_select %p279, %s25, 1
          %p281 = scmp.lt.s32.totalorder %s278, 3
          %s282 = scalar_select %p281, %s278, 3
          %s283 = smul.addr %s280, 4
          %s284 = sadd.s32 %s282, %s283
          %s285 = smul.addr %s284, 8
          %s286 = scalar_lea.vmem %s0, %s285
          %s287 = smul.u32 2, %s26
        $region44: #{linear_attention_forward.1} parent=39 // pred_fallthru
          _
      $region40: #{linear_attention_forward.1} parent=5 // pred_fallthru
        _
      %p288 = scmp.le.s32.totalorder 1, %s18
      %p289 = scmp.lt.s32.totalorder %s18, 5
      %p290 = pnand %p288, %p289
      %p291 = pneg %p290
      // Predicated region
      $region45: #{linear_attention_forward.1} parent=5 // pred_check
        _
      $region46: #{linear_attention_forward.1} parent=5 // pred_check_branch
        %293 = sbr.rel (%p290) target = $region48
      $region47: #{linear_attention_forward.1} parent=5 // pred_region
        %s294 = ssub.s32 %s18, 1
        %s295 = smul.u32 2, %s28
        %p296 = scmp.lt.s32.totalorder %s27, 1
        %s297 = scalar_select %p296, %s27, 1
        %p298 = scmp.lt.s32.totalorder %s295, 3
        %s299 = scalar_select %p298, %s295, 3
        %s300 = smul.addr %s297, 4
        %s301 = sadd.s32 %s299, %s300
        %s302 = smul.addr %s301, 8
        %s303 = scalar_lea.vmem %s0, %s302
        %p304 = pneg %p58
        %p305 = pneg %p55
        %p306 = pneg %p79
        %p307 = pneg %p76
        %p308 = pneg %p100
        %p309 = pneg %p97
        %p310 = pneg %p121
        %p311 = pneg %p118
        %p312 = pneg %p142
        %p313 = pneg %p139
        %p314 = pneg %p163
        %p315 = pneg %p160
        %p316 = pneg %p184
        %p317 = pneg %p181
        %p318 = pneg %p212
        %p319 = pneg %p209
        %s320 = sand.u32 %s199, 1
        %s321 = scalar_lea.sflag [#allocation4], %s320
        %s322 = sand.u32 %s199, 1
        %s323 = smul.addr %s322, 16
        %s324 = scalar_lea.vmem [#allocation3], %s323
        %p325 = pneg %p238
        %p326 = pneg %p235
        %p327 = scmp.lt.s32.totalorder %s27, 1
        %s328 = scalar_select %p327, %s27, 1
        %s329 = scalar_lea.vmem %s8, %s328
        %s330 = smul.u32 2, %s28
        %p331 = scmp.lt.s32.totalorder %s27, 1
        %s332 = scalar_select %p331, %s27, 1
        %p333 = scmp.lt.s32.totalorder %s330, 3
        %s334 = scalar_select %p333, %s330, 3
        %s335 = smul.addr %s332, 4
        %s336 = sadd.s32 %s334, %s335
        %s337 = smul.addr %s336, 8
        %s338 = scalar_lea.vmem %s0, %s337
        %s339 = smul.u32 2, %s28
        %s340 = smul.u32 2, %s28
        %p341 = scmp.lt.s32.totalorder %s27, 1
        %s342 = scalar_select %p341, %s27, 1
        %s343 = scalar_lea.vmem %s8, %s342
        %p344 = scmp.eq.s32.totalorder %s28, 0
        // Predicated region
        $region49: #{linear_attention_forward.1} parent=47 // pred_check
          %p345 = pneg %p344
        $region50: #{linear_attention_forward.1} parent=47 // pred_check_branch
          %347 = sbr.rel (%p345) target = $region52
        $region51: #{linear_attention_forward.1} parent=47 // pred_region
          %348 = vst [vmem:[#allocation2] sm:$0x1] 0.0
        $region52: #{linear_attention_forward.1} parent=47 // pred_fallthru
          _
        %v349 = vld [vmem:[%s338] sm:$0xff]
        %v350 = vld [vmem:[%s338 + $0x8] sm:$0xff]
        %v351 = vld [vmem:[%s1] sm:$0xff]
        %v352 = vld [vmem:[%s1 + $0x8] sm:$0xff]
        %v353 = vld [vmem:[%s1 + $0x10] sm:$0xff]
        %v354 = vld [vmem:[%s1 + $0x18] sm:$0xff]
        %v355 = vld [vmem:[%s1 + $0x20] sm:$0xff]
        %v356 = vld [vmem:[%s1 + $0x28] sm:$0xff]
        %v357 = vld [vmem:[%s1 + $0x30] sm:$0xff]
        %v358 = vld [vmem:[%s1 + $0x38] sm:$0xff]
        %v359 = vld [vmem:[%s1 + $0x40] sm:$0xff]
        %v360 = vld [vmem:[%s1 + $0x48] sm:$0xff]
        %v361 = vld [vmem:[%s1 + $0x50] sm:$0xff]
        %v362 = vld [vmem:[%s1 + $0x58] sm:$0xff]
        %v363 = vld [vmem:[%s2] sm:$0x7]
        %v365 = vlaneseq
        %v366 = vshrl.u32 %v365, 7
        %v367 = vsub.s32 0, %v366
        %v368 = vrot.slane %v363, %v367
        %v369 = vlaneseq
        %v370 = vshrl.u32 %v369, 7
        %v371 = vsub.s32 1, %v370
        %v372 = vrot.slane %v363, %v371
        %v373 = vlaneseq
        %v374 = vshrl.u32 %v373, 7
        %v375 = vsub.s32 2, %v374
        %v376 = vrot.slane %v363, %v375
        %vm380 = vcmask 261120
        %v382 = vsel %vm380, %v349, 0
        %v385 = vsel %vm380, %v350, 0
        %387 = vmatprep.subr.mxu0 0.0
        %388 = vmatpush1.msra.mxu0 0.0
        %389 = vmatprep.subr.mxu0 0.0
        %390 = vmatpush1.msra.mxu0 0.0
        %391 = vmatprep.subr.mxu0 0.0
        %392 = vmatpush1.msra.mxu0 0.0
        %393 = vmatprep.subr.mxu0 0.0
        %394 = vmatpush1.msra.mxu0 0.0
        %395 = vmatprep.subr.mxu0 0.0
        %396 = vmatpush1.msra.mxu0 0.0
        %397 = vmatprep.subr.mxu0 0.0
        %398 = vmatpush1.msra.mxu0 0.0
        %399 = vmatprep.subr.mxu0 0.0
        %400 = vmatpush1.msra.mxu0 0.0
        %401 = vmatprep.subr.mxu0 0.0
        %402 = vmatpush1.msra.mxu0 0.0
        %403 = vmatprep.subr.mxu0 0.0
        %404 = vmatpush1.msra.mxu0 0.0
        %405 = vmatprep.subr.mxu0 0.0
        %406 = vmatpush1.msra.mxu0 0.0
        %407 = vmatprep.subr.mxu0 0.0
        %408 = vmatpush1.msra.mxu0 0.0
        %409 = vmatprep.subr.mxu0 0.0
        %410 = vmatpush1.msra.mxu0 0.0
        %411 = vmatprep.subr.mxu0 %v361
        %412 = vmatpush1.msra.mxu0 %v360
        %413 = vmatprep.subr.mxu0 %v358
        %414 = vmatpush1.msra.mxu0 %v357
        %415 = vmatprep.subr.mxu0 %v355
        %416 = vmatpush1.msra.mxu0 %v354
        %417 = vmatprep.subr.mxu0 %v352
        %418 = vmatpush1.msra.mxu0 %v351
        %419 = vmatprep.subr.mxu0 0.0
        %420 = vmatpush2.msra.mxu0 0.0
        %421 = vmatprep.subr.mxu0 0.0
        %422 = vmatpush2.msra.mxu0 0.0
        %423 = vmatprep.subr.mxu0 0.0
        %424 = vmatpush2.msra.mxu0 0.0
        %425 = vmatprep.subr.mxu0 0.0
        %426 = vmatpush2.msra.mxu0 0.0
        %427 = vmatprep.subr.mxu0 0.0
        %428 = vmatpush2.msra.mxu0 0.0
        %429 = vmatprep.subr.mxu0 0.0
        %430 = vmatpush2.msra.mxu0 0.0
        %431 = vmatprep.subr.mxu0 0.0
        %432 = vmatpush2.msra.mxu0 0.0
        %433 = vmatprep.subr.mxu0 0.0
        %434 = vmatpush2.msra.mxu0 0.0
        %435 = vmatprep.subr.mxu0 0.0
        %436 = vmatpush2.msra.mxu0 0.0
        %437 = vmatprep.subr.mxu0 0.0
        %438 = vmatpush2.msra.mxu0 0.0
        %439 = vmatprep.subr.mxu0 0.0
        %440 = vmatpush2.msra.mxu0 0.0
        %441 = vmatprep.subr.mxu0 0.0
        %442 = vmatpush2.msra.mxu0 0.0
        %443 = vmatprep.subr.mxu0 0.0
        %444 = vmatpush2.msra.mxu0 0.0
        %445 = vmatprep.subr.mxu0 0.0
        %446 = vmatpush2.msra.mxu0 0.0
        %447 = vmatprep.subr.mxu0 0.0
        %448 = vmatpush2.msra.mxu0 0.0
        %449 = vmatprep.subr.mxu0 0.0
        %450 = vmatpush2.msra.mxu0 0.0
        %451 = vmatprep.mubr.f32.mxu0 0.0
        %452 = vmatmul.mubr.f32.gmra.mxu0 %v382
        %v453 = vpop.f32.mrf.mxu0
        %v454 = vadd.f32 %v368, %v453
        %v455 = vpop.f32.mrf.mxu0
        %v456 = vadd.f32 %v372, %v455
        %457 = vmatprep.mubr.f32.mxu0 0.0
        %458 = vmatmul.mubr.f32.gmra.mxu0 %v385
        %v459 = vpop.f32.mrf.mxu0
        %v460 = vadd.f32 %v368, %v459
        %v461 = vpop.f32.mrf.mxu0
        %v462 = vadd.f32 %v372, %v461
        %463 = vdwg.mxu0
        %464 = vmatprep.subr.mxu0 0.0
        %465 = vmatpush1.msra.mxu0 0.0
        %466 = vmatprep.subr.mxu0 0.0
        %467 = vmatpush1.msra.mxu0 0.0
        %468 = vmatprep.subr.mxu0 0.0
        %469 = vmatpush1.msra.mxu0 0.0
        %470 = vmatprep.subr.mxu0 0.0
        %471 = vmatpush1.msra.mxu0 0.0
        %472 = vmatprep.subr.mxu0 0.0
        %473 = vmatpush1.msra.mxu0 0.0
        %474 = vmatprep.subr.mxu0 0.0
        %475 = vmatpush1.msra.mxu0 0.0
        %476 = vmatprep.subr.mxu0 0.0
        %477 = vmatpush1.msra.mxu0 0.0
        %478 = vmatprep.subr.mxu0 0.0
        %479 = vmatpush1.msra.mxu0 0.0
        %480 = vmatprep.subr.mxu0 0.0
        %481 = vmatpush1.msra.mxu0 0.0
        %482 = vmatprep.subr.mxu0 0.0
        %483 = vmatpush1.msra.mxu0 0.0
        %484 = vmatprep.subr.mxu0 0.0
        %485 = vmatpush1.msra.mxu0 0.0
        %486 = vmatprep.subr.mxu0 0.0
        %487 = vmatpush1.msra.mxu0 0.0
        %488 = vmatprep.subr.mxu0 0.0
        %489 = vmatpush1.msra.mxu0 %v362
        %490 = vmatprep.subr.mxu0 0.0
        %491 = vmatpush1.msra.mxu0 %v359
        %492 = vmatprep.subr.mxu0 0.0
        %493 = vmatpush1.msra.mxu0 %v356
        %494 = vmatprep.subr.mxu0 0.0
        %495 = vmatpush1.msra.mxu0 %v353
        %496 = vmatprep.subr.mxu0 0.0
        %497 = vmatpush2.msra.mxu0 0.0
        %498 = vmatprep.subr.mxu0 0.0
        %499 = vmatpush2.msra.mxu0 0.0
        %500 = vmatprep.subr.mxu0 0.0
        %501 = vmatpush2.msra.mxu0 0.0
        %502 = vmatprep.subr.mxu0 0.0
        %503 = vmatpush2.msra.mxu0 0.0
        %504 = vmatprep.subr.mxu0 0.0
        %505 = vmatpush2.msra.mxu0 0.0
        %506 = vmatprep.subr.mxu0 0.0
        %507 = vmatpush2.msra.mxu0 0.0
        %508 = vmatprep.subr.mxu0 0.0
        %509 = vmatpush2.msra.mxu0 0.0
        %510 = vmatprep.subr.mxu0 0.0
        %511 = vmatpush2.msra.mxu0 0.0
        %512 = vmatprep.subr.mxu0 0.0
        %513 = vmatpush2.msra.mxu0 0.0
        %514 = vmatprep.subr.mxu0 0.0
        %515 = vmatpush2.msra.mxu0 0.0
        %516 = vmatprep.subr.mxu0 0.0
        %517 = vmatpush2.msra.mxu0 0.0
        %518 = vmatprep.subr.mxu0 0.0
        %519 = vmatpush2.msra.mxu0 0.0
        %520 = vmatprep.subr.mxu0 0.0
        %521 = vmatpush2.msra.mxu0 0.0
        %522 = vmatprep.subr.mxu0 0.0
        %523 = vmatpush2.msra.mxu0 0.0
        %524 = vmatprep.subr.mxu0 0.0
        %525 = vmatpush2.msra.mxu0 0.0
        %526 = vmatprep.subr.mxu0 0.0
        %527 = vmatpush2.msra.mxu0 0.0
        %528 = vmatprep.mubr.f32.mxu0 0.0
        %529 = vmatmul.mubr.f32.gmra.mxu0 %v382
        %v530 = vpop.f32.mrf.mxu0
        %v531 = vadd.f32 %v376, %v530
        %v532 = vpop.f32.mrf.mxu0
        %533 = vmatprep.mubr.f32.mxu0 0.0
        %534 = vmatmul.mubr.f32.gmra.mxu0 %v385
        %v535 = vpop.f32.mrf.mxu0
        %v536 = vadd.f32 %v376, %v535
        %v537 = vpop.f32.mrf.mxu0
        %538 = vdwg.mxu0
        %v539 = vmul.f32 %v454, %v456
        %v540 = vmul.f32 %v460, %v462
        %v541 = vld [vmem:[%s4] sm:$0xff]
        %v542 = vld [vmem:[%s4 + $0x8] sm:$0xff]
        %v543 = vld [vmem:[%s4 + $0x10] sm:$0xff]
        %v544 = vld [vmem:[%s4 + $0x18] sm:$0xff]
        %v545 = vld [vmem:[%s4 + $0x20] sm:$0xff]
        %v546 = vld [vmem:[%s4 + $0x28] sm:$0xff]
        %v547 = vld [vmem:[%s4 + $0x30] sm:$0xff]
        %v548 = vld [vmem:[%s4 + $0x38] sm:$0xff]
        %v549 = vld [vmem:[%s4 + $0x40] sm:$0xff]
        %v550 = vld [vmem:[%s4 + $0x48] sm:$0xff]
        %v551 = vld [vmem:[%s4 + $0x50] sm:$0xff]
        %v552 = vld [vmem:[%s4 + $0x58] sm:$0xff]
        %v553 = vld [vmem:[%s4 + $0x60] sm:$0xff]
        %v554 = vld [vmem:[%s4 + $0x68] sm:$0xff]
        %v555 = vld [vmem:[%s4 + $0x70] sm:$0xff]
        %v556 = vld [vmem:[%s4 + $0x78] sm:$0xff]
        %557 = vmatprep.subr.mxu0 0.0
        %558 = vmatpush1.msra.mxu0 %v556
        %559 = vmatprep.subr.mxu0 0.0
        %560 = vmatpush1.msra.mxu0 %v555
        %561 = vmatprep.subr.mxu0 0.0
        %562 = vmatpush1.msra.mxu0 %v554
        %563 = vmatprep.subr.mxu0 0.0
        %564 = vmatpush1.msra.mxu0 %v553
        %565 = vmatprep.subr.mxu0 0.0
        %566 = vmatpush1.msra.mxu0 %v552
        %567 = vmatprep.subr.mxu0 0.0
        %568 = vmatpush1.msra.mxu0 %v551
        %569 = vmatprep.subr.mxu0 0.0
        %570 = vmatpush1.msra.mxu0 %v550
        %571 = vmatprep.subr.mxu0 0.0
        %572 = vmatpush1.msra.mxu0 %v549
        %573 = vmatprep.subr.mxu0 0.0
        %574 = vmatpush1.msra.mxu0 %v548
        %575 = vmatprep.subr.mxu0 0.0
        %576 = vmatpush1.msra.mxu0 %v547
        %577 = vmatprep.subr.mxu0 0.0
        %578 = vmatpush1.msra.mxu0 %v546
        %579 = vmatprep.subr.mxu0 0.0
        %580 = vmatpush1.msra.mxu0 %v545
        %581 = vmatprep.subr.mxu0 0.0
        %582 = vmatpush1.msra.mxu0 %v544
        %583 = vmatprep.subr.mxu0 0.0
        %584 = vmatpush1.msra.mxu0 %v543
        %585 = vmatprep.subr.mxu0 0.0
        %586 = vmatpush1.msra.mxu0 %v542
        %587 = vmatprep.subr.mxu0 0.0
        %588 = vmatpush1.msra.mxu0 %v541
        %589 = vmatprep.subr.mxu0 0.0
        %590 = vmatpush2.msra.mxu0 0.0
        %591 = vmatprep.subr.mxu0 0.0
        %592 = vmatpush2.msra.mxu0 0.0
        %593 = vmatprep.subr.mxu0 0.0
        %594 = vmatpush2.msra.mxu0 0.0
        %595 = vmatprep.subr.mxu0 0.0
        %596 = vmatpush2.msra.mxu0 0.0
        %597 = vmatprep.subr.mxu0 0.0
        %598 = vmatpush2.msra.mxu0 0.0
        %599 = vmatprep.subr.mxu0 0.0
        %600 = vmatpush2.msra.mxu0 0.0
        %601 = vmatprep.subr.mxu0 0.0
        %602 = vmatpush2.msra.mxu0 0.0
        %603 = vmatprep.subr.mxu0 0.0
        %604 = vmatpush2.msra.mxu0 0.0
        %605 = vmatprep.subr.mxu0 0.0
        %606 = vmatpush2.msra.mxu0 0.0
        %607 = vmatprep.subr.mxu0 0.0
        %608 = vmatpush2.msra.mxu0 0.0
        %609 = vmatprep.subr.mxu0 0.0
        %610 = vmatpush2.msra.mxu0 0.0
        %611 = vmatprep.subr.mxu0 0.0
        %612 = vmatpush2.msra.mxu0 0.0
        %613 = vmatprep.subr.mxu0 0.0
        %614 = vmatpush2.msra.mxu0 0.0
        %615 = vmatprep.subr.mxu0 0.0
        %616 = vmatpush2.msra.mxu0 0.0
        %617 = vmatprep.subr.mxu0 0.0
        %618 = vmatpush2.msra.mxu0 0.0
        %619 = vmatprep.subr.mxu0 0.0
        %620 = vmatpush2.msra.mxu0 0.0
        %621 = vmatprep.mubr.f32.mxu0 0.0
        %622 = vmatmul.mubr.f32.gmra.mxu0 %v539
        %v623 = vpop.f32.mrf.mxu0
        %v624 = vadd.f32 0.0, %v623
        %v625 = vpop.f32.mrf.mxu0
        %626 = vmatprep.mubr.f32.mxu0 0.0
        %627 = vmatmul.mubr.f32.gmra.mxu0 %v540
        %v628 = vpop.f32.mrf.mxu0
        %v629 = vadd.f32 0.0, %v628
        %v630 = vpop.f32.mrf.mxu0
        %631 = vdwg.mxu0
        %v632 = vld [vmem:[%s3] sm:$0xff]
        %v633 = vld [vmem:[%s3 + $0x8] sm:$0xff]
        %v634 = vld [vmem:[#allocation2] sm:$0x1]
        %v636 = vlaneseq
        %v637 = vshrl.u32 %v636, 7
        %v638 = vsub.s32 0, %v637
        %v639 = vrot.slane %v634, %v638
        %vm641 = vcmask 130048
        %v643 = vsel %vm641, %v632, 0
        %v646 = vsel %vm641, %v633, 0
        %648 = vmatprep.subr.mxu0 0.0
        %649 = vmatpush1.msra.mxu0 0.0
        %650 = vmatprep.subr.mxu0 0.0
        %651 = vmatpush1.msra.mxu0 0.0
        %652 = vmatprep.subr.mxu0 0.0
        %653 = vmatpush1.msra.mxu0 0.0
        %654 = vmatprep.subr.mxu0 0.0
        %655 = vmatpush1.msra.mxu0 0.0
        %656 = vmatprep.subr.mxu0 0.0
        %657 = vmatpush1.msra.mxu0 0.0
        %658 = vmatprep.subr.mxu0 0.0
        %659 = vmatpush1.msra.mxu0 0.0
        %660 = vmatprep.subr.mxu0 0.0
        %661 = vmatpush1.msra.mxu0 0.0
        %662 = vmatprep.subr.mxu0 0.0
        %663 = vmatpush1.msra.mxu0 0.0
        %664 = vmatprep.subr.mxu0 0.0
        %665 = vmatpush1.msra.mxu0 0.0
        %666 = vmatprep.subr.mxu0 0.0
        %667 = vmatpush1.msra.mxu0 0.0
        %668 = vmatprep.subr.mxu0 0.0
        %669 = vmatpush1.msra.mxu0 0.0
        %670 = vmatprep.subr.mxu0 0.0
        %671 = vmatpush1.msra.mxu0 0.0
        %672 = vmatprep.subr.mxu0 0.0
        %673 = vmatpush1.msra.mxu0 0.0
        %674 = vmatprep.subr.mxu0 0.0
        %675 = vmatpush1.msra.mxu0 0.0
        %676 = vmatprep.subr.mxu0 0.0
        %677 = vmatpush1.msra.mxu0 %v629
        %678 = vmatprep.subr.mxu0 0.0
        %679 = vmatpush1.msra.mxu0 %v624
        %680 = vmatprep.subr.mxu0 0.0
        %681 = vmatpush2.msra.mxu0 0.0
        %682 = vmatprep.subr.mxu0 0.0
        %683 = vmatpush2.msra.mxu0 0.0
        %684 = vmatprep.subr.mxu0 0.0
        %685 = vmatpush2.msra.mxu0 0.0
        %686 = vmatprep.subr.mxu0 0.0
        %687 = vmatpush2.msra.mxu0 0.0
        %688 = vmatprep.subr.mxu0 0.0
        %689 = vmatpush2.msra.mxu0 0.0
        %690 = vmatprep.subr.mxu0 0.0
        %691 = vmatpush2.msra.mxu0 0.0
        %692 = vmatprep.subr.mxu0 0.0
        %693 = vmatpush2.msra.mxu0 0.0
        %694 = vmatprep.subr.mxu0 0.0
        %695 = vmatpush2.msra.mxu0 0.0
        %696 = vmatprep.subr.mxu0 0.0
        %697 = vmatpush2.msra.mxu0 0.0
        %698 = vmatprep.subr.mxu0 0.0
        %699 = vmatpush2.msra.mxu0 0.0
        %700 = vmatprep.subr.mxu0 0.0
        %701 = vmatpush2.msra.mxu0 0.0
        %702 = vmatprep.subr.mxu0 0.0
        %703 = vmatpush2.msra.mxu0 0.0
        %704 = vmatprep.subr.mxu0 0.0
        %705 = vmatpush2.msra.mxu0 0.0
        %706 = vmatprep.subr.mxu0 0.0
        %707 = vmatpush2.msra.mxu0 0.0
        %708 = vmatprep.subr.mxu0 0.0
        %709 = vmatpush2.msra.mxu0 0.0
        %710 = vmatprep.subr.mxu0 0.0
        %711 = vmatpush2.msra.mxu0 0.0
        %712 = vmatprep.mubr.f32.mxu0 0.0
        %713 = vmatmul.mubr.f32.gmra.mxu0 %v643
        %v714 = vpop.f32.mrf.mxu0
        %v715 = vadd.f32 %v639, %v714
        %v716 = vpop.f32.mrf.mxu0
        %717 = vmatprep.mubr.f32.mxu0 0.0
        %718 = vmatmul.mubr.f32.gmra.mxu0 %v646
        %v719 = vpop.f32.mrf.mxu0
        %v720 = vadd.f32 %v639, %v719
        %v721 = vpop.f32.mrf.mxu0
        %722 = vdwg.mxu0
        %v723 = vmul.f32 %v715, %v531
        %v724 = vmul.f32 %v720, %v536
        %v725 = vld [vmem:[%s5] sm:$0xff]
        %v726 = vld [vmem:[%s5 + $0x8] sm:$0xff]
        %v727 = vld [vmem:[%s5 + $0x10] sm:$0xff]
        %v728 = vld [vmem:[%s5 + $0x18] sm:$0xff]
        %v729 = vld [vmem:[%s5 + $0x20] sm:$0xff]
        %v730 = vld [vmem:[%s5 + $0x28] sm:$0xff]
        %v731 = vld [vmem:[%s5 + $0x30] sm:$0xff]
        %v732 = vld [vmem:[%s5 + $0x38] sm:$0xff]
        %v733 = vld [vmem:[%s5 + $0x40] sm:$0xff]
        %v734 = vld [vmem:[%s5 + $0x48] sm:$0xff]
        %v735 = vld [vmem:[%s5 + $0x50] sm:$0xff]
        %v736 = vld [vmem:[%s5 + $0x58] sm:$0xff]
        %v737 = vld [vmem:[%s5 + $0x60] sm:$0xff]
        %v738 = vld [vmem:[%s5 + $0x68] sm:$0xff]
        %v739 = vld [vmem:[%s5 + $0x70] sm:$0xff]
        %v740 = vld [vmem:[%s5 + $0x78] sm:$0xff]
        %v741 = vld [vmem:[%s6] sm:$0x1]
        %v743 = vlaneseq
        %v744 = vshrl.u32 %v743, 7
        %v745 = vsub.s32 0, %v744
        %v746 = vrot.slane %v741, %v745
        %748 = vmatprep.subr.mxu0 0.0
        %749 = vmatpush1.msra.mxu0 %v740
        %750 = vmatprep.subr.mxu0 0.0
        %751 = vmatpush1.msra.mxu0 %v739
        %752 = vmatprep.subr.mxu0 0.0
        %753 = vmatpush1.msra.mxu0 %v738
        %754 = vmatprep.subr.mxu0 0.0
        %755 = vmatpush1.msra.mxu0 %v737
        %756 = vmatprep.subr.mxu0 0.0
        %757 = vmatpush1.msra.mxu0 %v736
        %758 = vmatprep.subr.mxu0 0.0
        %759 = vmatpush1.msra.mxu0 %v735
        %760 = vmatprep.subr.mxu0 0.0
        %761 = vmatpush1.msra.mxu0 %v734
        %762 = vmatprep.subr.mxu0 0.0
        %763 = vmatpush1.msra.mxu0 %v733
        %764 = vmatprep.subr.mxu0 0.0
        %765 = vmatpush1.msra.mxu0 %v732
        %766 = vmatprep.subr.mxu0 0.0
        %767 = vmatpush1.msra.mxu0 %v731
        %768 = vmatprep.subr.mxu0 0.0
        %769 = vmatpush1.msra.mxu0 %v730
        %770 = vmatprep.subr.mxu0 0.0
        %771 = vmatpush1.msra.mxu0 %v729
        %772 = vmatprep.subr.mxu0 0.0
        %773 = vmatpush1.msra.mxu0 %v728
        %774 = vmatprep.subr.mxu0 0.0
        %775 = vmatpush1.msra.mxu0 %v727
        %776 = vmatprep.subr.mxu0 0.0
        %777 = vmatpush1.msra.mxu0 %v726
        %778 = vmatprep.subr.mxu0 0.0
        %779 = vmatpush1.msra.mxu0 %v725
        %780 = vmatprep.subr.mxu0 0.0
        %781 = vmatpush2.msra.mxu0 0.0
        %782 = vmatprep.subr.mxu0 0.0
        %783 = vmatpush2.msra.mxu0 0.0
        %784 = vmatprep.subr.mxu0 0.0
        %785 = vmatpush2.msra.mxu0 0.0
        %786 = vmatprep.subr.mxu0 0.0
        %787 = vmatpush2.msra.mxu0 0.0
        %788 = vmatprep.subr.mxu0 0.0
        %789 = vmatpush2.msra.mxu0 0.0
        %790 = vmatprep.subr.mxu0 0.0
        %791 = vmatpush2.msra.mxu0 0.0
        %792 = vmatprep.subr.mxu0 0.0
        %793 = vmatpush2.msra.mxu0 0.0
        %794 = vmatprep.subr.mxu0 0.0
        %795 = vmatpush2.msra.mxu0 0.0
        %796 = vmatprep.subr.mxu0 0.0
        %797 = vmatpush2.msra.mxu0 0.0
        %798 = vmatprep.subr.mxu0 0.0
        %799 = vmatpush2.msra.mxu0 0.0
        %800 = vmatprep.subr.mxu0 0.0
        %801 = vmatpush2.msra.mxu0 0.0
        %802 = vmatprep.subr.mxu0 0.0
        %803 = vmatpush2.msra.mxu0 0.0
        %804 = vmatprep.subr.mxu0 0.0
        %805 = vmatpush2.msra.mxu0 0.0
        %806 = vmatprep.subr.mxu0 0.0
        %807 = vmatpush2.msra.mxu0 0.0
        %808 = vmatprep.subr.mxu0 0.0
        %809 = vmatpush2.msra.mxu0 0.0
        %810 = vmatprep.subr.mxu0 0.0
        %811 = vmatpush2.msra.mxu0 0.0
        %812 = vmatprep.mubr.f32.mxu0 0.0
        %813 = vmatmul.mubr.f32.gmra.mxu0 %v723
        %v814 = vpop.f32.mrf.mxu0
        %v815 = vadd.f32 %v746, %v814
        %v816 = vpop.f32.mrf.mxu0
        %817 = vmatprep.mubr.f32.mxu0 0.0
        %818 = vmatmul.mubr.f32.gmra.mxu0 %v724
        %v819 = vpop.f32.mrf.mxu0
        %v820 = vadd.f32 %v746, %v819
        %v821 = vpop.f32.mrf.mxu0
        %822 = vdwg.mxu0
        %823 = vst [vmem:[%s324] sm:$0xff] %v815
        %824 = vst [vmem:[%s324 + $0x8] sm:$0xff] %v820
        %825 = vst [vmem:[#allocation2 - $0x7] sm:$0x80] %v720
        %p826 = scmp.eq.s32.totalorder %s28, 1
        // Predicated region
        $region53: #{linear_attention_forward.1} parent=47 // pred_check
          %p827 = pneg %p826
        $region54: #{linear_attention_forward.1} parent=47 // pred_check_branch
          %829 = sbr.rel (%p827) target = $region56
        $region55: #{linear_attention_forward.1} parent=47 // pred_region
          %v830 = vld [vmem:[#allocation2] sm:$0x1]
          %831 = vst [vmem:[%s343] sm:$0x1] %v830
        $region56: #{linear_attention_forward.1} parent=47 // pred_fallthru
          _
        %s832 = sand.u32 %s199, 1
        %s833 = scalar_lea.sflag [#allocation4], %s832
        %s834 = sand.u32 %s199, 1
        %s835 = smul.addr %s834, 16
        %s836 = scalar_lea.vmem [#allocation3], %s835
        %p837 = scmp.lt.s32.totalorder %s27, 1
        %s838 = scalar_select %p837, %s27, 1
        %s839 = scalar_lea.vmem %s8, %s838
        // Predicated region
        $region57: #{linear_attention_forward.1} parent=47 // pred_check
          %p840 = pneg %p209
        $region58: #{linear_attention_forward.1} parent=47 // pred_check_branch
          %842 = sbr.rel (%p840) target = $region60
        $region59: #{linear_attention_forward.1} parent=47 // pred_region
          %s843 = smul.u32 2, %s28
          %s845 = ssub.s32 256, 256
          %846 = vsyncadd %s833, %s845
          %s847 = smul.addr %s27, 4
          %s848 = sadd.s32 %s843, %s847
          %s849 = smul.addr %s848, 128
          %s850 = scalar_lea.hbm %s7, %s849
          %s851 = sshll.u32 %s836, 4
          %s852 = int_to_ptr.vmem [resolvable:$true] %s851
          %857 = dma.vmem_to_hbm [thread:$0]  %s852, 256, %s850, %s833, 128, 128, 8
        $region60: #{linear_attention_forward.1} parent=47 // pred_fallthru
          _
        // Predicated region
        $region61: #{linear_attention_forward.1} parent=47 // pred_check
          %p858 = pneg %p235
        $region62: #{linear_attention_forward.1} parent=47 // pred_check_branch
          %860 = sbr.rel (%p858) target = $region64
        $region63: #{linear_attention_forward.1} parent=47 // pred_region
          _
        $region64: #{linear_attention_forward.1} parent=47 // pred_fallthru
          _
      $region48: #{linear_attention_forward.1} parent=5 // pred_fallthru
        _
      %p861 = scmp.le.s32.totalorder 2, %s18
      // Predicated region
      $region65: #{linear_attention_forward.1} parent=5 // pred_check
        %p862 = pneg %p861
      $region66: #{linear_attention_forward.1} parent=5 // pred_check_branch
        %864 = sbr.rel (%p862) target = $region68
      $region67: #{linear_attention_forward.1} parent=5 // pred_region
        %s865 = ssub.s32 %s18, 2
        // Predicated region
        $region69: #{linear_attention_forward.1} parent=67 // pred_check
          %p866 = pneg %p215
        $region70: #{linear_attention_forward.1} parent=67 // pred_check_branch
          %868 = sbr.rel (%p866) target = $region72
        $region71: #{linear_attention_forward.1} parent=67 // pred_region
          %s869 = sand.u32 %s200, 1
          %s870 = scalar_lea.sflag [#allocation4], %s869
          %s871 = sand.u32 %s200, 1
          %s872 = smul.addr %s871, 16
          %s873 = scalar_lea.vmem [#allocation3], %s872
          %874 = dma.done %s870, 256
        $region72: #{linear_attention_forward.1} parent=67 // pred_fallthru
          _
        // Predicated region
        $region73: #{linear_attention_forward.1} parent=67 // pred_check
          %p875 = pneg %p241
        $region74: #{linear_attention_forward.1} parent=67 // pred_check_branch
          %877 = sbr.rel (%p875) target = $region76
        $region75: #{linear_attention_forward.1} parent=67 // pred_region
          %p878 = scmp.lt.s32.totalorder %s29, 1
          %s879 = scalar_select %p878, %s29, 1
          %s880 = scalar_lea.vmem %s8, %s879
        $region76: #{linear_attention_forward.1} parent=67 // pred_fallthru
          _
      $region68: #{linear_attention_forward.1} parent=5 // pred_fallthru
        _
    $region6: #{linear_attention_forward.1} parent=1 // loop_footer
      %s22 = sadd.s32 1, %s18
    $region7: #{linear_attention_forward.1} parent=1 // loop_footer_branch
      %17 = sbr.rel target = $region3
    $region8: #{linear_attention_forward.1} parent=1 // loop_exit
      _
    %881 = vsyncpa [#allocation4], 1
    %s882 = scalar_lea.sflag [#allocation4], 1
    %883 = vsyncpa %s882, 1

</llo_original>
